<compile_context>
chip_gen: v6e
topology: v6e:2x2x1
jax: 0.10.0
libtpu: 0.0.40
codegen_flags: <defaults>
</compile_context>

<pallas_src>
import math
import numpy as np
import jax
import jax.numpy as jnp
from jax import lax
from jax.experimental import pallas as pl
from jax.experimental.pallas import tpu as pltpu


def _time_embed_kernel(t_ref, pe_ref, w1_ref, b1_ref, w2_ref, b2_ref, o_ref):
    # t_ref : VMEM int32 [B, 1]         timesteps
    # pe_ref: VMEM f32   [max_len, D]   sinusoidal PE table (middle axis squeezed)
    # w1_ref: VMEM bf16  [D, D]         first Linear weight, stored [in, out]
    # b1_ref: VMEM f32   [1, D]
    # w2_ref: VMEM bf16  [D, D]         second Linear weight, stored [in, out]
    # b2_ref: VMEM f32   [1, D]
    # o_ref : VMEM f32   [1, B, D]
    B = o_ref.shape[1]
    max_len = pe_ref.shape[0]

    # One-hot MXU gather: pe[timesteps] -> (B, D).
    # OOB timesteps produce an all-zero one-hot row (safe, no wild VMEM reads).
    t_col = t_ref[...]                                                    # (B, 1) int32
    iota = lax.broadcasted_iota(jnp.int32, (B, max_len), 1)               # (B, max_len)
    onehot = (t_col == iota).astype(jnp.bfloat16)                         # (B, max_len)
    x = jnp.dot(onehot, pe_ref[...].astype(jnp.bfloat16),
                preferred_element_type=jnp.float32)                       # (B, D) f32

    # Linear -> SiLU -> Linear; bf16 MXU inputs, f32 accumulation, f32 elementwise.
    h = jnp.dot(x.astype(jnp.bfloat16), w1_ref[...],
                preferred_element_type=jnp.float32) + b1_ref[...]
    h = h * jax.nn.sigmoid(h)                                             # SiLU in f32 (EUP)
    y = jnp.dot(h.astype(jnp.bfloat16), w2_ref[...],
                preferred_element_type=jnp.float32) + b2_ref[...]

    # Emit the permuted (1, B, D) layout directly (lane-dense, D = 128).
    o_ref[0] = y.astype(o_ref.dtype)


def timestep_embedder_pallas(timesteps, pe2d, w1, b1, w2, b2):
    """Pallas implementation of TimestepEmbedder.forward.

    timesteps: int32 [B]
    pe2d:      float32 [max_len, D]   (PE table with the middle axis squeezed)
    w1, w2:    [D, D] stored [in, out]; bf16 recommended
    b1, b2:    float32 [1, D]
    returns:   float32 [1, B, D]
    """
    B = timesteps.shape[0]
    max_len, D = pe2d.shape
    t_col = timesteps.reshape(B, 1).astype(jnp.int32)   # (B, 1) VMEM copy of timesteps

    vmem = pl.BlockSpec(memory_space=pltpu.MemorySpace.VMEM)

    flops = 2 * B * max_len * D + 2 * (2 * B * D * D)       # one-hot gather + two linears
    bytes_accessed = (t_col.size * 4 + pe2d.size * 4
                      + w1.size * w1.dtype.itemsize + w2.size * w2.dtype.itemsize
                      + b1.size * 4 + b2.size * 4 + B * D * 4)
    cost = pl.CostEstimate(flops=flops, transcendentals=B * D,
                           bytes_accessed=bytes_accessed)

    return pl.pallas_call(
        _time_embed_kernel,
        out_shape=jax.ShapeDtypeStruct((1, B, D), jnp.float32),
        in_specs=[
            vmem,  # timesteps (B, 1)
            vmem,  # pe table
            vmem,  # w1
            vmem,  # b1
            vmem,  # w2
            vmem,  # b2
        ],
        out_specs=vmem,
        cost_estimate=cost,
    )(t_col, pe2d, w1, b1, w2, b2)


def make_sinusoidal_pe(max_len, d_model):
    """Standard PositionalEncoding buffer, shape [max_len, 1, d_model]."""
    position = np.arange(max_len, dtype=np.float32)[:, None]
    div_term = np.exp(
        np.arange(0, d_model, 2, dtype=np.float32) * (-math.log(10000.0) / d_model)
    )
    pe = np.zeros((max_len, d_model), dtype=np.float32)
    pe[:, 0::2] = np.sin(position * div_term)
    pe[:, 1::2] = np.cos(position * div_term)
    return jnp.asarray(pe[:, None, :])  # [max_len, 1, d_model]


def reference_forward(timesteps, pe, w1, b1, w2, b2):
    """Plain-JAX (f32) reference matching the PyTorch module exactly."""
    x = pe[timesteps]                       # (B, 1, D)
    h = x @ w1 + b1[0]
    h = h * jax.nn.sigmoid(h)
    y = h @ w2 + b2[0]
    return jnp.transpose(y, (1, 0, 2))      # (1, B, D)


if __name__ == "__main__":
    latent_dim = 128   # D (lane-aligned)
    batch = 8          # B (sublane-aligned)
    max_len = 64

    key = jax.random.PRNGKey(0)
    k_w1, k_b1, k_w2, k_b2, k_t = jax.random.split(key, 5)

    # Deterministic params, PyTorch nn.Linear-style init: U(-1/sqrt(fan_in), 1/sqrt(fan_in)).
    # Weights stored as [in, out] so the kernel computes x @ W + b.
    bound = 1.0 / math.sqrt(latent_dim)
    w1 = jax.random.uniform(k_w1, (latent_dim, latent_dim), jnp.float32, -bound, bound)
    b1 = jax.random.uniform(k_b1, (1, latent_dim), jnp.float32, -bound, bound)
    w2 = jax.random.uniform(k_w2, (latent_dim, latent_dim), jnp.float32, -bound, bound)
    b2 = jax.random.uniform(k_b2, (1, latent_dim), jnp.float32, -bound, bound)

    pe3d = make_sinusoidal_pe(max_len, latent_dim)   # [max_len, 1, D] (module buffer)
    pe2d = pe3d[:, 0, :]                             # [max_len, D] view for the kernel
    timesteps = jax.random.randint(k_t, (batch,), 0, max_len, dtype=jnp.int32)

    # Weights are stored / DMA'd as bf16 (one-time cast, outside the per-call path).
    w1_bf16 = w1.astype(jnp.bfloat16)
    w2_bf16 = w2.astype(jnp.bfloat16)

    out = timestep_embedder_pallas(timesteps, pe2d, w1_bf16, b1, w2_bf16, b2)
    out = jax.block_until_ready(out)

    ref = reference_forward(timesteps, pe3d, w1, b1, w2, b2)
    assert out.shape == (1, batch, latent_dim), out.shape
    # bf16 weight/activation MXU inputs (f32 accumulation) -> relaxed tolerance vs f32 reference.
    np.testing.assert_allclose(np.asarray(out), np.asarray(ref), rtol=2e-2, atol=2e-2)

    print("KERNEL_OK")
</pallas_src>

<mosaic_0001>
module attributes {stable_mosaic.version = 11 : i64} {
  func.func @_time_embed_kernel(%arg0: memref<8x1xi32, #tpu.memory_space<vmem>>, %arg1: memref<64x128xf32, #tpu.memory_space<vmem>>, %arg2: memref<128x128xbf16, #tpu.memory_space<vmem>>, %arg3: memref<1x128xf32, #tpu.memory_space<vmem>>, %arg4: memref<128x128xbf16, #tpu.memory_space<vmem>>, %arg5: memref<1x128xf32, #tpu.memory_space<vmem>>, %arg6: memref<1x8x128xf32, #tpu.memory_space<vmem>>) attributes {dimension_semantics = [], scalar_prefetch = 0 : i64, scratch_operands = 0 : i64, tpu.core_type = #tpu.core_type<tc>} {
    %c0 = arith.constant 0 : index
    %c0_0 = arith.constant 0 : index
    %0 = vector.load %arg0[%c0, %c0_0] : memref<8x1xi32, #tpu.memory_space<vmem>>, vector<8x1xi32>
    %1 = tpu.iota {dimensions = array<i32: 1>} : vector<8x64xi32>
    %2 = vector.broadcast %0 : vector<8x1xi32> to vector<8x64xi32>
    %3 = arith.cmpi eq, %2, %1 : vector<8x64xi32>
    %4 = arith.extui %3 : vector<8x64xi1> to vector<8x64xi32>
    %5 = arith.sitofp %4 : vector<8x64xi32> to vector<8x64xf32>
    %6 = arith.truncf %5 : vector<8x64xf32> to vector<8x64xbf16>
    %c0_1 = arith.constant 0 : index
    %c0_2 = arith.constant 0 : index
    %7 = vector.load %arg1[%c0_1, %c0_2] : memref<64x128xf32, #tpu.memory_space<vmem>>, vector<64x128xf32>
    %8 = arith.truncf %7 : vector<64x128xf32> to vector<64x128xbf16>
    %cst = arith.constant dense<0.000000e+00> : vector<8x128xf32>
    %9 = tpu.matmul %6, %8, %cst {dimension_numbers = #tpu.dot_dimension_numbers<[1], [0], [0], [1], [0, 0, 1, 1], [], []>} : vector<8x64xbf16>, vector<64x128xbf16>, vector<8x128xf32> -> vector<8x128xf32>
    %10 = arith.truncf %9 : vector<8x128xf32> to vector<8x128xbf16>
    %c0_3 = arith.constant 0 : index
    %c0_4 = arith.constant 0 : index
    %11 = vector.load %arg2[%c0_3, %c0_4] : memref<128x128xbf16, #tpu.memory_space<vmem>>, vector<128x128xbf16>
    %cst_5 = arith.constant dense<0.000000e+00> : vector<8x128xf32>
    %12 = tpu.matmul %10, %11, %cst_5 {dimension_numbers = #tpu.dot_dimension_numbers<[1], [0], [0], [1], [0, 0, 1, 1], [], []>} : vector<8x128xbf16>, vector<128x128xbf16>, vector<8x128xf32> -> vector<8x128xf32>
    %c0_6 = arith.constant 0 : index
    %c0_7 = arith.constant 0 : index
    %13 = vector.load %arg3[%c0_6, %c0_7] : memref<1x128xf32, #tpu.memory_space<vmem>>, vector<1x128xf32>
    %14 = vector.broadcast %13 : vector<1x128xf32> to vector<8x128xf32>
    %15 = arith.addf %12, %14 : vector<8x128xf32>
    %16 = arith.negf %15 : vector<8x128xf32>
    %17 = math.exp %16 : vector<8x128xf32>
    %cst_8 = arith.constant 1.000000e+00 : f32
    %18 = vector.broadcast %cst_8 : f32 to vector<8x128xf32>
    %19 = arith.addf %18, %17 : vector<8x128xf32>
    %20 = arith.divf %18, %19 : vector<8x128xf32>
    %21 = arith.mulf %15, %20 : vector<8x128xf32>
    %22 = arith.truncf %21 : vector<8x128xf32> to vector<8x128xbf16>
    %c0_9 = arith.constant 0 : index
    %c0_10 = arith.constant 0 : index
    %23 = vector.load %arg4[%c0_9, %c0_10] : memref<128x128xbf16, #tpu.memory_space<vmem>>, vector<128x128xbf16>
    %cst_11 = arith.constant dense<0.000000e+00> : vector<8x128xf32>
    %24 = tpu.matmul %22, %23, %cst_11 {dimension_numbers = #tpu.dot_dimension_numbers<[1], [0], [0], [1], [0, 0, 1, 1], [], []>} : vector<8x128xbf16>, vector<128x128xbf16>, vector<8x128xf32> -> vector<8x128xf32>
    %c0_12 = arith.constant 0 : index
    %c0_13 = arith.constant 0 : index
    %25 = vector.load %arg5[%c0_12, %c0_13] : memref<1x128xf32, #tpu.memory_space<vmem>>, vector<1x128xf32>
    %26 = vector.broadcast %25 : vector<1x128xf32> to vector<8x128xf32>
    %27 = arith.addf %24, %26 : vector<8x128xf32>
    %c0_14 = arith.constant 0 : index
    %c0_15 = arith.constant 0 : index
    %c0_16 = arith.constant 0 : index
    %28 = vector.load %arg6[%c0_14, %c0_15, %c0_16] : memref<1x8x128xf32, #tpu.memory_space<vmem>>, vector<1x8x128xf32>
    %29 = vector.shape_cast %28 : vector<1x8x128xf32> to vector<8x128xf32>
    %30 = vector.shape_cast %27 : vector<8x128xf32> to vector<1x8x128xf32>
    tpu.vector_store %arg6[%c0_14, %c0_15, %c0_16], %30 {strides = array<i32>} : memref<1x8x128xf32, #tpu.memory_space<vmem>>, vector<1x8x128xf32>,
    return
  }
}

</mosaic_0001>

<llo_original>
// kernel: tpu_custom_call.1
$region0: #{tpu_custom_call.1}
  #allocation0 [shape = 'u32[]', space=smem, size = 0x4, offset = 0x4, fixed_abs, tag = 'smem constant byte address 0x4 - core index']
  #allocation1 [shape = 'u32[144,128]{1,0:T(1,128)}', space=vmem, size = 0x12000, scoped, tag = 'internal scratch']
  %s0 = inlined_call_operand.vmem [shape: s32[8,1], index: 0, kind: input, shape index: {}]
  %s1 = inlined_call_operand.hbm [shape: f32[64,128], index: 1, kind: input, shape index: {}]
  %s2 = inlined_call_operand.hbm [shape: bf16[128,128], index: 2, kind: input, shape index: {}]
  %s3 = inlined_call_operand.vmem [shape: f32[1,128], index: 3, kind: input, shape index: {}]
  %s4 = inlined_call_operand.hbm [shape: bf16[128,128], index: 4, kind: input, shape index: {}]
  %s5 = inlined_call_operand.vmem [shape: f32[1,128], index: 5, kind: input, shape index: {}]
  %s6 = inlined_call_operand.hbm [shape: f32[1,8,128], index: 6, kind: output, shape index: {}]
  %s7 = sld [smem:[#allocation0]]
  $region46: #{tpu_custom_call.1} parent=0
    _
  %s9 = ssub.s32 1, %s7
  %s10 = scalar_select 0, %s9, %s7
  $region1: #{tpu_custom_call.1} parent=0
    #allocation2 [shape = 'u8[32768]{0}', space=vmem, size = 0x8000, scoped, tag = 'input window, operand 1, single buffered']
    #allocation3 [shape = 's32[1]{0}', space=sflag, size = 0x4, scoped, tag = 'scoped memory for tpu_custom_call.1']
    #allocation4 [shape = 's32[1]{0}', space=sflag, size = 0x4, scoped, tag = 'scoped memory for tpu_custom_call.1']
    #allocation5 [shape = 'u8[32768]{0}', space=vmem, size = 0x8000, scoped, tag = 'input window, operand 2, single buffered']
    #allocation6 [shape = 's32[1]{0}', space=sflag, size = 0x4, scoped, tag = 'scoped memory for tpu_custom_call.1']
    #allocation7 [shape = 'u8[32768]{0}', space=vmem, size = 0x8000, scoped, tag = 'input window, operand 4, single buffered']
    #allocation8 [shape = 'u8[4096]{0}', space=vmem, size = 0x1000, scoped, tag = 'output window, operand 0, single buffered']
    %11 = vsyncpa [#allocation3], 0
    %12 = vsyncpa [#allocation6], 0
    %13 = vsyncpa [#allocation4], 0
    // Predicated region
    $region2: #{tpu_custom_call.1} parent=1 // pred_check
      _
    $region3: #{tpu_custom_call.1} parent=1 // pred_check_branch
      %15 = sbr.rel (0) target = $region5
    $region4: #{tpu_custom_call.1} parent=1 // pred_region
      _
    $region5: #{tpu_custom_call.1} parent=1 // pred_fallthru
      _
    // Predicated region
    $region6: #{tpu_custom_call.1} parent=1 // pred_check
      _
    $region7: #{tpu_custom_call.1} parent=1 // pred_check_branch
      %17 = sbr.rel (0) target = $region9
    $region8: #{tpu_custom_call.1} parent=1 // pred_region
      %s19 = ssub.s32 1024, 1024
      %20 = vsyncadd [#allocation3], %s19
      %s21 = sshll.u32 [#allocation2], 4
      %s22 = int_to_ptr.vmem [resolvable:$true] %s21
      %27 = dma.hbm_to_vmem [thread:$0]  %s1, 1024, %s22, [#allocation3], 128, 128, 8
    $region9: #{tpu_custom_call.1} parent=1 // pred_fallthru
      _
    // Predicated region
    $region10: #{tpu_custom_call.1} parent=1 // pred_check
      _
    $region11: #{tpu_custom_call.1} parent=1 // pred_check_branch
      %29 = sbr.rel (0) target = $region13
    $region12: #{tpu_custom_call.1} parent=1 // pred_region
      %s31 = ssub.s32 1024, 1024
      %32 = vsyncadd [#allocation6], %s31
      %s33 = sshll.u32 [#allocation5], 4
      %s34 = int_to_ptr.vmem [resolvable:$true] %s33
      %39 = dma.hbm_to_vmem [thread:$0]  %s2, 1024, %s34, [#allocation6], 64, 64, 4
    $region13: #{tpu_custom_call.1} parent=1 // pred_fallthru
      _
    // Predicated region
    $region14: #{tpu_custom_call.1} parent=1 // pred_check
      _
    $region15: #{tpu_custom_call.1} parent=1 // pred_check_branch
      %41 = sbr.rel (0) target = $region17
    $region16: #{tpu_custom_call.1} parent=1 // pred_region
      _
    $region17: #{tpu_custom_call.1} parent=1 // pred_fallthru
      _
    // Predicated region
    $region18: #{tpu_custom_call.1} parent=1 // pred_check
      _
    $region19: #{tpu_custom_call.1} parent=1 // pred_check_branch
      %43 = sbr.rel (0) target = $region21
    $region20: #{tpu_custom_call.1} parent=1 // pred_region
      %s45 = ssub.s32 1024, 1024
      %46 = vsyncadd [#allocation6], %s45
      %s47 = sshll.u32 [#allocation7], 4
      %s48 = int_to_ptr.vmem [resolvable:$true] %s47
      %53 = dma.hbm_to_vmem [thread:$0]  %s4, 1024, %s48, [#allocation6], 64, 64, 4
    $region21: #{tpu_custom_call.1} parent=1 // pred_fallthru
      _
    // Predicated region
    $region22: #{tpu_custom_call.1} parent=1 // pred_check
      _
    $region23: #{tpu_custom_call.1} parent=1 // pred_check_branch
      %55 = sbr.rel (0) target = $region25
    $region24: #{tpu_custom_call.1} parent=1 // pred_region
      _
    $region25: #{tpu_custom_call.1} parent=1 // pred_fallthru
      _
    // Predicated region
    $region26: #{tpu_custom_call.1} parent=1 // pred_check
      _
    $region27: #{tpu_custom_call.1} parent=1 // pred_check_branch
      %57 = sbr.rel (0) target = $region29
    $region28: #{tpu_custom_call.1} parent=1 // pred_region
      %58 = dma.done [#allocation3], 1024
    $region29: #{tpu_custom_call.1} parent=1 // pred_fallthru
      _
    // Predicated region
    $region30: #{tpu_custom_call.1} parent=1 // pred_check
      _
    $region31: #{tpu_custom_call.1} parent=1 // pred_check_branch
      %60 = sbr.rel (0) target = $region33
    $region32: #{tpu_custom_call.1} parent=1 // pred_region
      %61 = dma.done [#allocation6], 1024
    $region33: #{tpu_custom_call.1} parent=1 // pred_fallthru
      _
    // Predicated region
    $region34: #{tpu_custom_call.1} parent=1 // pred_check
      _
    $region35: #{tpu_custom_call.1} parent=1 // pred_check_branch
      %63 = sbr.rel (0) target = $region37
    $region36: #{tpu_custom_call.1} parent=1 // pred_region
      %64 = dma.done [#allocation6], 1024
    $region37: #{tpu_custom_call.1} parent=1 // pred_fallthru
      _
    %v66 = vld [vmem:[%s0] sm:$0xff]
    %v67 = vlaneseq
    %v68 = vand.u32 %v67, 127
    %69 = vset.pattern.permute.xlu0 0
    %70 = vperm.xlu0 %69, %v66
    %v71 = vpop.permute.xlu0 %70
    %vm72 = vcmp.eq.s32.totalorder %v71, %v68
    %v73 = vsel %vm72, 1, 0
    %v74 = vcvt.s32.f32 %v73
    %v75 = vpack.c.bf16 %v74, %v74
    %v76 = vld [vmem:[#allocation2] sm:$0xff]
    %v77 = vld [vmem:[#allocation2 + $0x8] sm:$0xff]
    %v78 = vld [vmem:[#allocation2 + $0x10] sm:$0xff]
    %v79 = vld [vmem:[#allocation2 + $0x18] sm:$0xff]
    %v80 = vld [vmem:[#allocation2 + $0x20] sm:$0xff]
    %v81 = vld [vmem:[#allocation2 + $0x28] sm:$0xff]
    %v82 = vld [vmem:[#allocation2 + $0x30] sm:$0xff]
    %v83 = vld [vmem:[#allocation2 + $0x38] sm:$0xff]
    %v84 = vpack.c.bf16 %v77, %v76
    %v85 = vpack.c.bf16 %v79, %v78
    %v86 = vpack.c.bf16 %v81, %v80
    %v87 = vpack.c.bf16 %v83, %v82
    %vm88 = vcmask 523264
    %v90 = vsel %vm88, %v75, 0
    %92 = vmatprep.subr.bf16.mxu0 0
    %93 = vmatpush1.bf16.msra.mxu0 0
    %94 = vmatprep.subr.bf16.mxu0 0
    %95 = vmatpush1.bf16.msra.mxu0 0
    %96 = vmatprep.subr.bf16.mxu0 0
    %97 = vmatpush1.bf16.msra.mxu0 0
    %98 = vmatprep.subr.bf16.mxu0 0
    %99 = vmatpush1.bf16.msra.mxu0 0
    %100 = vmatprep.subr.bf16.mxu0 0
    %101 = vmatpush1.bf16.msra.mxu0 %v87
    %102 = vmatprep.subr.bf16.mxu0 0
    %103 = vmatpush1.bf16.msra.mxu0 %v86
    %104 = vmatprep.subr.bf16.mxu0 0
    %105 = vmatpush1.bf16.msra.mxu0 %v85
    %106 = vmatprep.subr.bf16.mxu0 0
    %107 = vmatpush1.bf16.msra.mxu0 %v84
    %108 = vmatprep.subr.bf16.mxu0 0
    %109 = vmatpush2.bf16.msra.mxu0 0
    %110 = vmatprep.subr.bf16.mxu0 0
    %111 = vmatpush2.bf16.msra.mxu0 0
    %112 = vmatprep.subr.bf16.mxu0 0
    %113 = vmatpush2.bf16.msra.mxu0 0
    %114 = vmatprep.subr.bf16.mxu0 0
    %115 = vmatpush2.bf16.msra.mxu0 0
    %116 = vmatprep.subr.bf16.mxu0 0
    %117 = vmatpush2.bf16.msra.mxu0 0
    %118 = vmatprep.subr.bf16.mxu0 0
    %119 = vmatpush2.bf16.msra.mxu0 0
    %120 = vmatprep.subr.bf16.mxu0 0
    %121 = vmatpush2.bf16.msra.mxu0 0
    %122 = vmatprep.subr.bf16.mxu0 0
    %123 = vmatpush2.bf16.msra.mxu0 0
    %124 = vmatprep.mubr.bf16.mxu0 0
    %125 = vmatmul.mubr.bf16.gmra.mxu0 %v90
    %v126 = vpop.f32.mrf.mxu0
    %v127 = vadd.f32 0.0, %v126
    %v128 = vpop.f32.mrf.mxu0
    %v129 = vpop.f32.mrf.mxu0
    %v130 = vpop.f32.mrf.mxu0
    %131 = vdwg.mxu0
    %v132 = vpack.c.bf16 %v127, %v127
    %v133 = vld [vmem:[#allocation5] sm:$0xf]
    %v134 = vld [vmem:[#allocation5 + $0x4] sm:$0xf]
    %v135 = vld [vmem:[#allocation5 + $0x8] sm:$0xf]
    %v136 = vld [vmem:[#allocation5 + $0xc] sm:$0xf]
    %v137 = vld [vmem:[#allocation5 + $0x10] sm:$0xf]
    %v138 = vld [vmem:[#allocation5 + $0x14] sm:$0xf]
    %v139 = vld [vmem:[#allocation5 + $0x18] sm:$0xf]
    %v140 = vld [vmem:[#allocation5 + $0x1c] sm:$0xf]
    %v141 = vld [vmem:[#allocation5 + $0x20] sm:$0xf]
    %v142 = vld [vmem:[#allocation5 + $0x24] sm:$0xf]
    %v143 = vld [vmem:[#allocation5 + $0x28] sm:$0xf]
    %v144 = vld [vmem:[#allocation5 + $0x2c] sm:$0xf]
    %v145 = vld [vmem:[#allocation5 + $0x30] sm:$0xf]
    %v146 = vld [vmem:[#allocation5 + $0x34] sm:$0xf]
    %v147 = vld [vmem:[#allocation5 + $0x38] sm:$0xf]
    %v148 = vld [vmem:[#allocation5 + $0x3c] sm:$0xf]
    %v149 = vld [vmem:[%s3] sm:$0x1]
    %v151 = vlaneseq
    %v152 = vshrl.u32 %v151, 7
    %v153 = vsub.s32 0, %v152
    %v154 = vrot.slane %v149, %v153
    %v172 = vunpack.c.l.b16 %v133
    %v173 = vunpack.c.l.b16 %v134
    %v174 = vunpack.c.l.b16 %v135
    %v175 = vunpack.c.l.b16 %v136
    %v176 = vunpack.c.l.b16 %v137
    %v177 = vunpack.c.l.b16 %v138
    %v178 = vunpack.c.l.b16 %v139
    %v179 = vunpack.c.l.b16 %v140
    %v180 = vunpack.c.l.b16 %v141
    %v181 = vunpack.c.l.b16 %v142
    %v182 = vunpack.c.l.b16 %v143
    %v183 = vunpack.c.l.b16 %v144
    %v184 = vunpack.c.l.b16 %v145
    %v185 = vunpack.c.l.b16 %v146
    %v186 = vunpack.c.l.b16 %v147
    %v187 = vunpack.c.l.b16 %v148
    %v188 = vpack.c.b16 %v173, %v172
    %v189 = vpack.c.b16 %v175, %v174
    %v190 = vpack.c.b16 %v177, %v176
    %v191 = vpack.c.b16 %v179, %v178
    %v192 = vpack.c.b16 %v181, %v180
    %v193 = vpack.c.b16 %v183, %v182
    %v194 = vpack.c.b16 %v185, %v184
    %v195 = vpack.c.b16 %v187, %v186
    %204 = vmatprep.subr.bf16.mxu0 0
    %205 = vmatpush1.bf16.msra.mxu0 %v195
    %206 = vmatprep.subr.bf16.mxu0 0
    %207 = vmatpush1.bf16.msra.mxu0 %v194
    %208 = vmatprep.subr.bf16.mxu0 0
    %209 = vmatpush1.bf16.msra.mxu0 %v193
    %210 = vmatprep.subr.bf16.mxu0 0
    %211 = vmatpush1.bf16.msra.mxu0 %v192
    %212 = vmatprep.subr.bf16.mxu0 0
    %213 = vmatpush1.bf16.msra.mxu0 %v191
    %214 = vmatprep.subr.bf16.mxu0 0
    %215 = vmatpush1.bf16.msra.mxu0 %v190
    %216 = vmatprep.subr.bf16.mxu0 0
    %217 = vmatpush1.bf16.msra.mxu0 %v189
    %218 = vmatprep.subr.bf16.mxu0 0
    %219 = vmatpush1.bf16.msra.mxu0 %v188
    %220 = vmatprep.subr.bf16.mxu0 0
    %221 = vmatpush2.bf16.msra.mxu0 0
    %222 = vmatprep.subr.bf16.mxu0 0
    %223 = vmatpush2.bf16.msra.mxu0 0
    %224 = vmatprep.subr.bf16.mxu0 0
    %225 = vmatpush2.bf16.msra.mxu0 0
    %226 = vmatprep.subr.bf16.mxu0 0
    %227 = vmatpush2.bf16.msra.mxu0 0
    %228 = vmatprep.subr.bf16.mxu0 0
    %229 = vmatpush2.bf16.msra.mxu0 0
    %230 = vmatprep.subr.bf16.mxu0 0
    %231 = vmatpush2.bf16.msra.mxu0 0
    %232 = vmatprep.subr.bf16.mxu0 0
    %233 = vmatpush2.bf16.msra.mxu0 0
    %234 = vmatprep.subr.bf16.mxu0 0
    %235 = vmatpush2.bf16.msra.mxu0 0
    %236 = vmatprep.mubr.bf16.mxu0 0
    %237 = vmatmul.mubr.bf16.gmra.mxu0 %v132
    %v238 = vpop.f32.mrf.mxu0
    %v239 = vadd.f32 %v154, %v238
    %v240 = vpop.f32.mrf.mxu0
    %v241 = vpop.f32.mrf.mxu0
    %v242 = vpop.f32.mrf.mxu0
    %243 = vdwg.mxu0
    %v244 = vxor.u32 %v239, 2147483648
    %v245 = vmul.f32 %v244, 1.442695
    %v246 = vpow.pop %v245
    %v247 = vadd.f32 %v246, 1.0
    %v248 = vrcp.pop %v247
    %v249 = vmul.f32 1.0, %v248
    %v250 = vmul.f32 %v239, %v249
    %v251 = vpack.c.bf16 %v250, %v250
    %v252 = vld [vmem:[#allocation7] sm:$0xf]
    %v253 = vld [vmem:[#allocation7 + $0x4] sm:$0xf]
    %v254 = vld [vmem:[#allocation7 + $0x8] sm:$0xf]
    %v255 = vld [vmem:[#allocation7 + $0xc] sm:$0xf]
    %v256 = vld [vmem:[#allocation7 + $0x10] sm:$0xf]
    %v257 = vld [vmem:[#allocation7 + $0x14] sm:$0xf]
    %v258 = vld [vmem:[#allocation7 + $0x18] sm:$0xf]
    %v259 = vld [vmem:[#allocation7 + $0x1c] sm:$0xf]
    %v260 = vld [vmem:[#allocation7 + $0x20] sm:$0xf]
    %v261 = vld [vmem:[#allocation7 + $0x24] sm:$0xf]
    %v262 = vld [vmem:[#allocation7 + $0x28] sm:$0xf]
    %v263 = vld [vmem:[#allocation7 + $0x2c] sm:$0xf]
    %v264 = vld [vmem:[#allocation7 + $0x30] sm:$0xf]
    %v265 = vld [vmem:[#allocation7 + $0x34] sm:$0xf]
    %v266 = vld [vmem:[#allocation7 + $0x38] sm:$0xf]
    %v267 = vld [vmem:[#allocation7 + $0x3c] sm:$0xf]
    %v268 = vld [vmem:[%s5] sm:$0x1]
    %v270 = vlaneseq
    %v271 = vshrl.u32 %v270, 7
    %v272 = vsub.s32 0, %v271
    %v273 = vrot.slane %v268, %v272
    %v291 = vunpack.c.l.b16 %v252
    %v292 = vunpack.c.l.b16 %v253
    %v293 = vunpack.c.l.b16 %v254
    %v294 = vunpack.c.l.b16 %v255
    %v295 = vunpack.c.l.b16 %v256
    %v296 = vunpack.c.l.b16 %v257
    %v297 = vunpack.c.l.b16 %v258
    %v298 = vunpack.c.l.b16 %v259
    %v299 = vunpack.c.l.b16 %v260
    %v300 = vunpack.c.l.b16 %v261
    %v301 = vunpack.c.l.b16 %v262
    %v302 = vunpack.c.l.b16 %v263
    %v303 = vunpack.c.l.b16 %v264
    %v304 = vunpack.c.l.b16 %v265
    %v305 = vunpack.c.l.b16 %v266
    %v306 = vunpack.c.l.b16 %v267
    %v307 = vpack.c.b16 %v292, %v291
    %v308 = vpack.c.b16 %v294, %v293
    %v309 = vpack.c.b16 %v296, %v295
    %v310 = vpack.c.b16 %v298, %v297
    %v311 = vpack.c.b16 %v300, %v299
    %v312 = vpack.c.b16 %v302, %v301
    %v313 = vpack.c.b16 %v304, %v303
    %v314 = vpack.c.b16 %v306, %v305
    %323 = vmatprep.subr.bf16.mxu0 0
    %324 = vmatpush1.bf16.msra.mxu0 %v314
    %325 = vmatprep.subr.bf16.mxu0 0
    %326 = vmatpush1.bf16.msra.mxu0 %v313
    %327 = vmatprep.subr.bf16.mxu0 0
    %328 = vmatpush1.bf16.msra.mxu0 %v312
    %329 = vmatprep.subr.bf16.mxu0 0
    %330 = vmatpush1.bf16.msra.mxu0 %v311
    %331 = vmatprep.subr.bf16.mxu0 0
    %332 = vmatpush1.bf16.msra.mxu0 %v310
    %333 = vmatprep.subr.bf16.mxu0 0
    %334 = vmatpush1.bf16.msra.mxu0 %v309
    %335 = vmatprep.subr.bf16.mxu0 0
    %336 = vmatpush1.bf16.msra.mxu0 %v308
    %337 = vmatprep.subr.bf16.mxu0 0
    %338 = vmatpush1.bf16.msra.mxu0 %v307
    %339 = vmatprep.subr.bf16.mxu0 0
    %340 = vmatpush2.bf16.msra.mxu0 0
    %341 = vmatprep.subr.bf16.mxu0 0
    %342 = vmatpush2.bf16.msra.mxu0 0
    %343 = vmatprep.subr.bf16.mxu0 0
    %344 = vmatpush2.bf16.msra.mxu0 0
    %345 = vmatprep.subr.bf16.mxu0 0
    %346 = vmatpush2.bf16.msra.mxu0 0
    %347 = vmatprep.subr.bf16.mxu0 0
    %348 = vmatpush2.bf16.msra.mxu0 0
    %349 = vmatprep.subr.bf16.mxu0 0
    %350 = vmatpush2.bf16.msra.mxu0 0
    %351 = vmatprep.subr.bf16.mxu0 0
    %352 = vmatpush2.bf16.msra.mxu0 0
    %353 = vmatprep.subr.bf16.mxu0 0
    %354 = vmatpush2.bf16.msra.mxu0 0
    %355 = vmatprep.mubr.bf16.mxu0 0
    %356 = vmatmul.mubr.bf16.gmra.mxu0 %v251
    %v357 = vpop.f32.mrf.mxu0
    %v358 = vadd.f32 %v273, %v357
    %v359 = vpop.f32.mrf.mxu0
    %v360 = vpop.f32.mrf.mxu0
    %v361 = vpop.f32.mrf.mxu0
    %362 = vdwg.mxu0
    %363 = vst [vmem:[#allocation8] sm:$0xff] %v358
    // Predicated region
    $region38: #{tpu_custom_call.1} parent=1 // pred_check
      _
    $region39: #{tpu_custom_call.1} parent=1 // pred_check_branch
      %365 = sbr.rel (0) target = $region41
    $region40: #{tpu_custom_call.1} parent=1 // pred_region
      %s367 = ssub.s32 128, 128
      %368 = vsyncadd [#allocation4], %s367
      %s370 = sshll.u32 [#allocation8], 4
      %s371 = int_to_ptr.vmem [resolvable:$true] %s370
      %373 = dma.vmem_to_hbm [thread:$0]  %s371, 128, %s6, [#allocation4]
    $region41: #{tpu_custom_call.1} parent=1 // pred_fallthru
      _
    // Predicated region
    $region42: #{tpu_custom_call.1} parent=1 // pred_check
      _
    $region43: #{tpu_custom_call.1} parent=1 // pred_check_branch
      %375 = sbr.rel (0) target = $region45
    $region44: #{tpu_custom_call.1} parent=1 // pred_region
      %376 = dma.done [#allocation4], 128
    $region45: #{tpu_custom_call.1} parent=1 // pred_fallthru
      _
    %377 = vsyncpa [#allocation3], 1
    %378 = vsyncpa [#allocation6], 1
    %379 = vsyncpa [#allocation4], 1

</llo_original>
